<compile_context>
chip_gen: v7x
topology: tpu7x:2x2x1
jax: 0.10.0
libtpu: 0.0.40
codegen_flags: <defaults>
</compile_context>

<pallas_src>
import functools

import jax
import jax.numpy as jnp
from jax.experimental import pallas as pl
from jax.experimental.pallas import tpu as pltpu


def _round_up(x, m):
    return ((x + m - 1) // m) * m


def dnn_classifier_kernel(x_ref, w1_ref, b1_ref, w2_ref, b2_ref, out_ref, acc_ref,
                          *, T, tT):
    t = pl.program_id(1)

    xb = x_ref[...]                                   # (BN, tT, D), native dtype
    if T % tT != 0:                                   # static: mask only if T tiling is ragged
        tidx = jax.lax.broadcasted_iota(jnp.int32, xb.shape, 1)
        xb = jnp.where(t * tT + tidx < T, xb, jnp.zeros_like(xb))

    # f32 time-sum; the 1/T of the mean is folded into w1.
    psum = jnp.sum(xb.astype(jnp.float32), axis=1)    # (BN, D)

    @pl.when(t == 0)
    def _():
        acc_ref[...] = jnp.zeros_like(acc_ref)

    acc_ref[...] += psum

    @pl.when(t == pl.num_programs(1) - 1)
    def _():
        feat = acc_ref[...].astype(w1_ref.dtype)      # bf16 -> single-pass MXU matmul
        h = jnp.maximum(
            jnp.dot(feat, w1_ref[...], preferred_element_type=jnp.float32)
            + b1_ref[...],
            0.0,
        )
        out_ref[...] = (
            jnp.dot(h, w2_ref[...], preferred_element_type=jnp.float32) + b2_ref[...]
        )


def dnn_classifier(x, params, *, block_batch=256, x_vmem_budget=8 << 20):
    """x: (B, T, 768), any float dtype (bf16 fast path). Returns (B, C) f32 logits."""
    B, T, D = x.shape
    H = params["w1"].shape[1]
    C = params["w2"].shape[1]

    # bf16 inputs take the bf16 MXU path; anything else computes in f32.
    compute_dtype = jnp.bfloat16 if x.dtype == jnp.bfloat16 else jnp.float32

    # Fold 1/T of the time-mean into w1 (one-time op on a 384 KiB weight).
    w1p = (params["w1"] * (1.0 / T)).astype(compute_dtype)
    b1 = params["b1"].astype(jnp.float32)

    # Pad the class dim to a lane-dense multiple of 128 (sliced off after the call).
    Cp = max(128, pl.cdiv(C, 128) * 128)
    w2p = jnp.zeros((H, Cp), jnp.float32).at[:, :C].set(params["w2"])
    b2p = jnp.zeros((1, Cp), jnp.float32).at[:, :C].set(params["b2"])

    # Batch tile: full batch for tiny B; otherwise a multiple of 8 that yields >=2 grid
    # steps (v7x megacore), capped at block_batch. No whole-array x padding: Pallas
    # masks the boundary block and every row's compute is independent.
    if B <= 16:
        BN = B
    else:
        BN = min(block_batch, _round_up(pl.cdiv(B, 2), 8))

    # Time tile: keep the double-buffered x tile within the VMEM budget.
    bytes_per_t = 2 * BN * D * x.dtype.itemsize       # both x buffers, one time step
    tT_cap = max(1, x_vmem_budget // bytes_per_t)
    tT = T if tT_cap >= T else max(8, (tT_cap // 8) * 8)

    grid = (pl.cdiv(B, BN), pl.cdiv(T, tT))

    # Rough VMEM footprint; raise the scoped limit only if the defaults would be tight.
    vmem_need = (
        2 * BN * tT * D * x.dtype.itemsize            # x double buffer
        + 2 * BN * Cp * 4                             # out double buffer
        + 2 * (w1p.size * w1p.dtype.itemsize + w2p.size * 4 + (H + Cp) * 4)
        + BN * D * 4                                  # time-sum scratch
    )
    compiler_kwargs = dict(dimension_semantics=("parallel", "arbitrary"))
    if vmem_need > (14 << 20):
        compiler_kwargs["vmem_limit_bytes"] = min(int(vmem_need * 5 // 4), 64 << 20)

    kernel = functools.partial(dnn_classifier_kernel, T=T, tT=tT)

    def const(shape):
        return pl.BlockSpec(shape, lambda b, t: (0,) * len(shape))

    out = pl.pallas_call(
        kernel,
        out_shape=jax.ShapeDtypeStruct((B, Cp), jnp.float32),
        grid=grid,
        in_specs=[
            pl.BlockSpec((BN, tT, D), lambda b, t: (b, t, 0)),   # batch/time tile of x
            const((D, H)), const((1, H)),                        # Linear(768,128)
            const((H, Cp)), const((1, Cp)),                      # Linear(128,C) padded
        ],
        out_specs=pl.BlockSpec((BN, Cp), lambda b, t: (b, 0)),
        scratch_shapes=[pltpu.VMEM((BN, D), jnp.float32)],
        compiler_params=pltpu.CompilerParams(**compiler_kwargs),
    )(x, w1p, b1, w2p, b2p)

    return out[:, :C]


def reference_forward(x, params):
    """Plain-JAX f32 replica of DNNClassifier.forward."""
    feat = jnp.mean(x.astype(jnp.float32), axis=1)               # (B, 768)
    h = jax.nn.relu(feat @ params["w1"] + params["b1"])          # (B, 128)
    return h @ params["w2"] + params["b2"]                       # (B, C)


def make_params(key, num_class, in_dim=768, hidden=128):
    k1, k2 = jax.random.split(key)

    def lin(k, fan_in, fan_out):
        # torch.nn.Linear default init: U(-1/sqrt(fan_in), 1/sqrt(fan_in)),
        # weight stored pre-transposed to (in, out) for channels-last matmul.
        bound = (1.0 / fan_in) ** 0.5
        kw, kb = jax.random.split(k)
        w = jax.random.uniform(kw, (fan_in, fan_out), jnp.float32, -bound, bound)
        b = jax.random.uniform(kb, (1, fan_out), jnp.float32, -bound, bound)
        return w, b

    w1, b1 = lin(k1, in_dim, hidden)
    w2, b2 = lin(k2, hidden, num_class)
    return {"w1": w1, "b1": b1, "w2": w2, "b2": b2}


if __name__ == "__main__":
    B, T, D, C = 2, 8, 768, 4   # batch, seq, input_dim (fixed by module), num_class

    key = jax.random.PRNGKey(0)
    kx, kp = jax.random.split(key)
    # Upstream features arrive as bf16: halves the dominant x HBM->VMEM DMA bytes.
    x = jax.random.normal(kx, (B, T, D), jnp.float32).astype(jnp.bfloat16)
    params = make_params(kp, C)

    out = jax.block_until_ready(dnn_classifier(x, params))
    ref = jax.block_until_ready(reference_forward(x, params))

    assert out.shape == (B, C), out.shape
    assert jnp.allclose(out, ref, atol=2e-2, rtol=2e-2), (out, ref)
    print("KERNEL_OK")
</pallas_src>

<mosaic_0001>
module attributes {stable_mosaic.version = 11 : i64} {
  func.func @dnn_classifier_kernel(%arg0: i32, %arg1: i32, %arg2: memref<2x8x768xbf16, #tpu.memory_space<vmem>>, %arg3: memref<768x128xbf16, #tpu.memory_space<vmem>>, %arg4: memref<1x128xf32, #tpu.memory_space<vmem>>, %arg5: memref<128x128xf32, #tpu.memory_space<vmem>>, %arg6: memref<1x128xf32, #tpu.memory_space<vmem>>, %arg7: memref<2x128xf32, #tpu.memory_space<vmem>>, %arg8: memref<2x768xf32, #tpu.memory_space<vmem>>) attributes {dimension_semantics = [#tpu.dimension_semantics<parallel>, #tpu.dimension_semantics<arbitrary>], iteration_bounds = array<i64: 1, 1>, scalar_prefetch = 0 : i64, scratch_operands = 1 : i64, tpu.core_type = #tpu.core_type<tc>, window_params = [{transform_indices = @transform_0, window_bounds = array<i64: 2, 8, 768>}, {pipeline_mode = #tpu.pipeline_mode<synchronous>, transform_indices = @transform_1, window_bounds = array<i64: 768, 128>}, {pipeline_mode = #tpu.pipeline_mode<synchronous>, transform_indices = @transform_2, window_bounds = array<i64: 1, 128>}, {pipeline_mode = #tpu.pipeline_mode<synchronous>, transform_indices = @transform_3, window_bounds = array<i64: 128, 128>}, {pipeline_mode = #tpu.pipeline_mode<synchronous>, transform_indices = @transform_4, window_bounds = array<i64: 1, 128>}, {transform_indices = @transform_5, window_bounds = array<i64: 2, 128>}]} {
    %c0 = arith.constant 0 : index
    %c0_0 = arith.constant 0 : index
    %c0_1 = arith.constant 0 : index
    %0 = vector.load %arg2[%c0, %c0_0, %c0_1] : memref<2x8x768xbf16, #tpu.memory_space<vmem>>, vector<2x8x768xbf16>
    %1 = arith.extf %0 : vector<2x8x768xbf16> to vector<2x8x768xf32>
    %cst = arith.constant dense<0.000000e+00> : vector<2x768xf32>
    %2 = vector.multi_reduction <add>, %1, %cst [1] : vector<2x8x768xf32> to vector<2x768xf32>
    %c0_i32 = arith.constant 0 : i32
    %3 = arith.cmpi eq, %arg1, %c0_i32 : i32
    %4 = arith.extui %3 : i1 to i32
    %c0_i32_2 = arith.constant 0 : i32
    %5 = arith.cmpi ne, %4, %c0_i32_2 : i32
    scf.if %5 {
      %cst_9 = arith.constant 0.000000e+00 : f32
      %12 = vector.broadcast %cst_9 : f32 to vector<2x768xf32>
      %c0_10 = arith.constant 0 : index
      %c0_11 = arith.constant 0 : index
      %13 = vector.load %arg8[%c0_10, %c0_11] : memref<2x768xf32, #tpu.memory_space<vmem>>, vector<2x768xf32>
      tpu.vector_store %arg8[%c0_10, %c0_11], %12 {strides = array<i32>} : memref<2x768xf32, #tpu.memory_space<vmem>>, vector<2x768xf32>,
    } else {
    }
    %c0_3 = arith.constant 0 : index
    %c0_4 = arith.constant 0 : index
    %6 = vector.load %arg8[%c0_3, %c0_4] : memref<2x768xf32, #tpu.memory_space<vmem>>, vector<2x768xf32>
    %7 = arith.addf %6, %2 : vector<2x768xf32>
    %c0_5 = arith.constant 0 : index
    %c0_6 = arith.constant 0 : index
    %8 = vector.load %arg8[%c0_5, %c0_6] : memref<2x768xf32, #tpu.memory_space<vmem>>, vector<2x768xf32>
    tpu.vector_store %arg8[%c0_5, %c0_6], %7 {strides = array<i32>} : memref<2x768xf32, #tpu.memory_space<vmem>>, vector<2x768xf32>,
    %c0_i32_7 = arith.constant 0 : i32
    %9 = arith.cmpi eq, %arg1, %c0_i32_7 : i32
    %10 = arith.extui %9 : i1 to i32
    %c0_i32_8 = arith.constant 0 : i32
    %11 = arith.cmpi ne, %10, %c0_i32_8 : i32
    scf.if %11 {
      %c0_9 = arith.constant 0 : index
      %c0_10 = arith.constant 0 : index
      %12 = vector.load %arg8[%c0_9, %c0_10] : memref<2x768xf32, #tpu.memory_space<vmem>>, vector<2x768xf32>
      %13 = arith.truncf %12 : vector<2x768xf32> to vector<2x768xbf16>
      %c0_11 = arith.constant 0 : index
      %c0_12 = arith.constant 0 : index
      %14 = vector.load %arg3[%c0_11, %c0_12] : memref<768x128xbf16, #tpu.memory_space<vmem>>, vector<768x128xbf16>
      %cst_13 = arith.constant dense<0.000000e+00> : vector<2x128xf32>
      %15 = tpu.matmul %13, %14, %cst_13 {dimension_numbers = #tpu.dot_dimension_numbers<[1], [0], [0], [1], [0, 0, 1, 1], [], []>} : vector<2x768xbf16>, vector<768x128xbf16>, vector<2x128xf32> -> vector<2x128xf32>
      %c0_14 = arith.constant 0 : index
      %c0_15 = arith.constant 0 : index
      %16 = vector.load %arg4[%c0_14, %c0_15] : memref<1x128xf32, #tpu.memory_space<vmem>>, vector<1x128xf32>
      %17 = vector.broadcast %16 : vector<1x128xf32> to vector<2x128xf32>
      %18 = arith.addf %15, %17 : vector<2x128xf32>
      %cst_16 = arith.constant 0.000000e+00 : f32
      %19 = vector.broadcast %cst_16 : f32 to vector<2x128xf32>
      %20 = arith.maximumf %18, %19 : vector<2x128xf32>
      %c0_17 = arith.constant 0 : index
      %c0_18 = arith.constant 0 : index
      %21 = vector.load %arg5[%c0_17, %c0_18] : memref<128x128xf32, #tpu.memory_space<vmem>>, vector<128x128xf32>
      %cst_19 = arith.constant dense<0.000000e+00> : vector<2x128xf32>
      %22 = tpu.matmul %20, %21, %cst_19 {dimension_numbers = #tpu.dot_dimension_numbers<[1], [0], [0], [1], [0, 0, 1, 1], [], []>} : vector<2x128xf32>, vector<128x128xf32>, vector<2x128xf32> -> vector<2x128xf32>
      %c0_20 = arith.constant 0 : index
      %c0_21 = arith.constant 0 : index
      %23 = vector.load %arg6[%c0_20, %c0_21] : memref<1x128xf32, #tpu.memory_space<vmem>>, vector<1x128xf32>
      %24 = vector.broadcast %23 : vector<1x128xf32> to vector<2x128xf32>
      %25 = arith.addf %22, %24 : vector<2x128xf32>
      %c0_22 = arith.constant 0 : index
      %c0_23 = arith.constant 0 : index
      %26 = vector.load %arg7[%c0_22, %c0_23] : memref<2x128xf32, #tpu.memory_space<vmem>>, vector<2x128xf32>
      tpu.vector_store %arg7[%c0_22, %c0_23], %25 {strides = array<i32>} : memref<2x128xf32, #tpu.memory_space<vmem>>, vector<2x128xf32>,
    } else {
    }
    return
  }
  func.func @transform_0(%arg0: i32, %arg1: i32) -> (i32, i32, i32) {
    %c0_i32 = arith.constant 0 : i32
    %c0_i32_0 = arith.constant 0 : i32
    return %arg0, %arg1, %c0_i32 : i32, i32, i32
  }
  func.func @transform_1(%arg0: i32, %arg1: i32) -> (i32, i32) {
    %c0_i32 = arith.constant 0 : i32
    %c0_i32_0 = arith.constant 0 : i32
    %c0_i32_1 = arith.constant 0 : i32
    return %c0_i32, %c0_i32_0 : i32, i32
  }
  func.func @transform_2(%arg0: i32, %arg1: i32) -> (i32, i32) {
    %c0_i32 = arith.constant 0 : i32
    %c0_i32_0 = arith.constant 0 : i32
    %c0_i32_1 = arith.constant 0 : i32
    return %c0_i32, %c0_i32_0 : i32, i32
  }
  func.func @transform_3(%arg0: i32, %arg1: i32) -> (i32, i32) {
    %c0_i32 = arith.constant 0 : i32
    %c0_i32_0 = arith.constant 0 : i32
    %c0_i32_1 = arith.constant 0 : i32
    return %c0_i32, %c0_i32_0 : i32, i32
  }
  func.func @transform_4(%arg0: i32, %arg1: i32) -> (i32, i32) {
    %c0_i32 = arith.constant 0 : i32
    %c0_i32_0 = arith.constant 0 : i32
    %c0_i32_1 = arith.constant 0 : i32
    return %c0_i32, %c0_i32_0 : i32, i32
  }
  func.func @transform_5(%arg0: i32, %arg1: i32) -> (i32, i32) {
    %c0_i32 = arith.constant 0 : i32
    %c0_i32_0 = arith.constant 0 : i32
    return %arg0, %c0_i32 : i32, i32
  }
}

</mosaic_0001>

<llo_original>
// kernel: tpu_custom_call.1
$region0: #{tpu_custom_call.1}
  #allocation0 [shape = 'u32[]', space=smem, size = 0x4, offset = 0x4, fixed_abs, tag = 'smem constant byte address 0x4 - core index']
  #allocation1 [shape = 'u32[144,128]{1,0:T(1,128)}', space=vmem, size = 0x12000, scoped, tag = 'internal scratch']
  #allocation2 [shape = 'f32[2,768]{1,0:T(2,128)}', space=vmem, size = 0x1800, scoped, tag = 'scratch operand']
  %s0 = inlined_call_operand.hbm [shape: bf16[2,8,768], index: 0, kind: input, shape index: {}]
  %s1 = inlined_call_operand.hbm [shape: bf16[768,128], index: 1, kind: input, shape index: {}]
  %s2 = inlined_call_operand.vmem [shape: f32[1,128], index: 2, kind: input, shape index: {}]
  %s3 = inlined_call_operand.hbm [shape: f32[128,128], index: 3, kind: input, shape index: {}]
  %s4 = inlined_call_operand.vmem [shape: f32[1,128], index: 4, kind: input, shape index: {}]
  %s5 = inlined_call_operand.hbm [shape: f32[2,128], index: 5, kind: output, shape index: {}]
  %s6 = sld [smem:[#allocation0]]
  $region50: #{tpu_custom_call.1} parent=0
    _
  %s8 = ssub.s32 1, %s6
  %s9 = scalar_select 0, %s8, %s6
  $region1: #{tpu_custom_call.1} parent=0
    #allocation3 [shape = 'u8[24576]{0}', space=vmem, size = 0x6000, scoped, tag = 'input window, operand 0, single buffered']
    #allocation4 [shape = 's32[1]{0}', space=sflag, size = 0x4, scoped, tag = 'scoped memory for tpu_custom_call.1']
    #allocation5 [shape = 's32[1]{0}', space=sflag, size = 0x4, scoped, tag = 'scoped memory for tpu_custom_call.1']
    #allocation6 [shape = 'u8[196608]{0}', space=vmem, size = 0x30000, scoped, tag = 'input window, operand 1, single buffered']
    #allocation7 [shape = 's32[1]{0}', space=sflag, size = 0x4, scoped, tag = 'scoped memory for tpu_custom_call.1']
    #allocation8 [shape = 'u8[65536]{0}', space=vmem, size = 0x10000, scoped, tag = 'input window, operand 3, single buffered']
    #allocation9 [shape = 'u8[1024]{0}', space=vmem, size = 0x400, scoped, tag = 'output window, operand 0, single buffered']
    %10 = vsyncpa [#allocation4], 0
    %11 = vsyncpa [#allocation7], 0
    %12 = vsyncpa [#allocation5], 0
    // Predicated region
    $region2: #{tpu_custom_call.1} parent=1 // pred_check
      _
    $region3: #{tpu_custom_call.1} parent=1 // pred_check_branch
      %14 = sbr.rel (0) target = $region5
    $region4: #{tpu_custom_call.1} parent=1 // pred_region
      %s16 = ssub.s32 768, 768
      %17 = vsyncadd [#allocation4], %s16
      %s18 = sshll.u32 [#allocation3], 4
      %s19 = int_to_ptr.vmem [resolvable:$true] %s18
      %24 = dma.hbm_to_vmem [thread:$0]  %s0, 768, %s19, [#allocation4], 384, 384, 24
    $region5: #{tpu_custom_call.1} parent=1 // pred_fallthru
      _
    // Predicated region
    $region6: #{tpu_custom_call.1} parent=1 // pred_check
      _
    $region7: #{tpu_custom_call.1} parent=1 // pred_check_branch
      %26 = sbr.rel (0) target = $region9
    $region8: #{tpu_custom_call.1} parent=1 // pred_region
      %s28 = ssub.s32 6144, 6144
      %29 = vsyncadd [#allocation7], %s28
      %s30 = sshll.u32 [#allocation6], 4
      %s31 = int_to_ptr.vmem [resolvable:$true] %s30
      %36 = dma.hbm_to_vmem [thread:$0]  %s1, 6144, %s31, [#allocation7], 64, 64, 4
    $region9: #{tpu_custom_call.1} parent=1 // pred_fallthru
      _
    // Predicated region
    $region10: #{tpu_custom_call.1} parent=1 // pred_check
      _
    $region11: #{tpu_custom_call.1} parent=1 // pred_check_branch
      %38 = sbr.rel (0) target = $region13
    $region12: #{tpu_custom_call.1} parent=1 // pred_region
      _
    $region13: #{tpu_custom_call.1} parent=1 // pred_fallthru
      _
    // Predicated region
    $region14: #{tpu_custom_call.1} parent=1 // pred_check
      _
    $region15: #{tpu_custom_call.1} parent=1 // pred_check_branch
      %40 = sbr.rel (0) target = $region17
    $region16: #{tpu_custom_call.1} parent=1 // pred_region
      %s42 = ssub.s32 2048, 2048
      %43 = vsyncadd [#allocation7], %s42
      %s44 = sshll.u32 [#allocation8], 4
      %s45 = int_to_ptr.vmem [resolvable:$true] %s44
      %50 = dma.hbm_to_vmem [thread:$0]  %s3, 2048, %s45, [#allocation7], 128, 128, 8
    $region17: #{tpu_custom_call.1} parent=1 // pred_fallthru
      _
    // Predicated region
    $region18: #{tpu_custom_call.1} parent=1 // pred_check
      _
    $region19: #{tpu_custom_call.1} parent=1 // pred_check_branch
      %52 = sbr.rel (0) target = $region21
    $region20: #{tpu_custom_call.1} parent=1 // pred_region
      _
    $region21: #{tpu_custom_call.1} parent=1 // pred_fallthru
      _
    // Predicated region
    $region22: #{tpu_custom_call.1} parent=1 // pred_check
      _
    $region23: #{tpu_custom_call.1} parent=1 // pred_check_branch
      %54 = sbr.rel (0) target = $region25
    $region24: #{tpu_custom_call.1} parent=1 // pred_region
      %55 = dma.done [#allocation4], 768
    $region25: #{tpu_custom_call.1} parent=1 // pred_fallthru
      _
    // Predicated region
    $region26: #{tpu_custom_call.1} parent=1 // pred_check
      _
    $region27: #{tpu_custom_call.1} parent=1 // pred_check_branch
      %57 = sbr.rel (0) target = $region29
    $region28: #{tpu_custom_call.1} parent=1 // pred_region
      %58 = dma.done [#allocation7], 6144
    $region29: #{tpu_custom_call.1} parent=1 // pred_fallthru
      _
    // Predicated region
    $region30: #{tpu_custom_call.1} parent=1 // pred_check
      _
    $region31: #{tpu_custom_call.1} parent=1 // pred_check_branch
      %60 = sbr.rel (0) target = $region33
    $region32: #{tpu_custom_call.1} parent=1 // pred_region
      %61 = dma.done [#allocation7], 2048
    $region33: #{tpu_custom_call.1} parent=1 // pred_fallthru
      _
    %v63 = vld [vmem:[#allocation3] sm:$0xff]
    %v64 = vld [vmem:[#allocation3 + $0x8] sm:$0xff]
    %v65 = vld [vmem:[#allocation3 + $0x10] sm:$0xff]
    %v66 = vld [vmem:[#allocation3 + $0x18] sm:$0xff]
    %v67 = vld [vmem:[#allocation3 + $0x20] sm:$0xff]
    %v68 = vld [vmem:[#allocation3 + $0x28] sm:$0xff]
    %v69 = vunpack.c.l.bf16 %v63
    %v70 = vunpack.c.h.bf16 %v63
    %v71 = vunpack.c.l.bf16 %v64
    %v72 = vunpack.c.h.bf16 %v64
    %v73 = vunpack.c.l.bf16 %v65
    %v74 = vunpack.c.h.bf16 %v65
    %v75 = vunpack.c.l.bf16 %v66
    %v76 = vunpack.c.h.bf16 %v66
    %v77 = vunpack.c.l.bf16 %v67
    %v78 = vunpack.c.h.bf16 %v67
    %v79 = vunpack.c.l.bf16 %v68
    %v80 = vunpack.c.h.bf16 %v68
    %v81 = vrot.slane %v69, 4
    %v82 = vadd.f32 %v69, %v81
    %v83 = vrot.slane %v82, 2
    %v84 = vadd.f32 %v82, %v83
    %v85 = vrot.slane %v84, 1
    %v86 = vadd.f32 %v84, %v85
    %v87 = vrot.slane %v70, 4
    %v88 = vadd.f32 %v70, %v87
    %v89 = vrot.slane %v88, 2
    %v90 = vadd.f32 %v88, %v89
    %v91 = vrot.slane %v90, 1
    %v92 = vadd.f32 %v90, %v91
    %v93 = vrot.slane %v71, 4
    %v94 = vadd.f32 %v71, %v93
    %v95 = vrot.slane %v94, 2
    %v96 = vadd.f32 %v94, %v95
    %v97 = vrot.slane %v96, 1
    %v98 = vadd.f32 %v96, %v97
    %v99 = vrot.slane %v72, 4
    %v100 = vadd.f32 %v72, %v99
    %v101 = vrot.slane %v100, 2
    %v102 = vadd.f32 %v100, %v101
    %v103 = vrot.slane %v102, 1
    %v104 = vadd.f32 %v102, %v103
    %v105 = vrot.slane %v73, 4
    %v106 = vadd.f32 %v73, %v105
    %v107 = vrot.slane %v106, 2
    %v108 = vadd.f32 %v106, %v107
    %v109 = vrot.slane %v108, 1
    %v110 = vadd.f32 %v108, %v109
    %v111 = vrot.slane %v74, 4
    %v112 = vadd.f32 %v74, %v111
    %v113 = vrot.slane %v112, 2
    %v114 = vadd.f32 %v112, %v113
    %v115 = vrot.slane %v114, 1
    %v116 = vadd.f32 %v114, %v115
    %v117 = vrot.slane %v75, 4
    %v118 = vadd.f32 %v75, %v117
    %v119 = vrot.slane %v118, 2
    %v120 = vadd.f32 %v118, %v119
    %v121 = vrot.slane %v120, 1
    %v122 = vadd.f32 %v120, %v121
    %v123 = vrot.slane %v76, 4
    %v124 = vadd.f32 %v76, %v123
    %v125 = vrot.slane %v124, 2
    %v126 = vadd.f32 %v124, %v125
    %v127 = vrot.slane %v126, 1
    %v128 = vadd.f32 %v126, %v127
    %v129 = vrot.slane %v77, 4
    %v130 = vadd.f32 %v77, %v129
    %v131 = vrot.slane %v130, 2
    %v132 = vadd.f32 %v130, %v131
    %v133 = vrot.slane %v132, 1
    %v134 = vadd.f32 %v132, %v133
    %v135 = vrot.slane %v78, 4
    %v136 = vadd.f32 %v78, %v135
    %v137 = vrot.slane %v136, 2
    %v138 = vadd.f32 %v136, %v137
    %v139 = vrot.slane %v138, 1
    %v140 = vadd.f32 %v138, %v139
    %v141 = vrot.slane %v79, 4
    %v142 = vadd.f32 %v79, %v141
    %v143 = vrot.slane %v142, 2
    %v144 = vadd.f32 %v142, %v143
    %v145 = vrot.slane %v144, 1
    %v146 = vadd.f32 %v144, %v145
    %v147 = vrot.slane %v80, 4
    %v148 = vadd.f32 %v80, %v147
    %v149 = vrot.slane %v148, 2
    %v150 = vadd.f32 %v148, %v149
    %v151 = vrot.slane %v150, 1
    %v152 = vadd.f32 %v150, %v151
    %p153 = scmp.eq.s32.totalorder 0, 0
    // Predicated region
    $region34: #{tpu_custom_call.1} parent=1 // pred_check
      %p154 = pneg %p153
    $region35: #{tpu_custom_call.1} parent=1 // pred_check_branch
      %156 = sbr.rel (%p154) target = $region37
    $region36: #{tpu_custom_call.1} parent=1 // pred_region
      %157 = vst [vmem:[#allocation2] sm:$0xff] 0.0
      %158 = vst [vmem:[#allocation2 + $0x8] sm:$0xf] 0.0
    $region37: #{tpu_custom_call.1} parent=1 // pred_fallthru
      _
    %v159 = vld [vmem:[#allocation2] sm:$0xff]
    %v160 = vld [vmem:[#allocation2 + $0x8] sm:$0xf]
    %v173 = vcombine.low %v86, %v92
    %v174 = vcombine.low %v98, %v104
    %v176 = vunpack.c.l.s4 1983009808
    %v177 = vunpack.c.0.s8 %v176
    %v178 = vlaneseq
    %v179 = vshrl.u32 %v178, 7
    %v180 = vsub.s32 %v177, %v179
    %v181 = vrot.slane %v173, %v180
    %v183 = vunpack.c.l.s4 1983009808
    %v184 = vunpack.c.0.s8 %v183
    %v185 = vlaneseq
    %v186 = vshrl.u32 %v185, 7
    %v187 = vsub.s32 %v184, %v186
    %v188 = vrot.slane %v174, %v187
    %v189 = vcombine.low %v181, %v188
    %v190 = vcombine.low %v110, %v116
    %v192 = vunpack.c.l.s4 1983009808
    %v193 = vunpack.c.0.s8 %v192
    %v194 = vlaneseq
    %v195 = vshrl.u32 %v194, 7
    %v196 = vsub.s32 %v193, %v195
    %v197 = vrot.slane %v190, %v196
    %v198 = vcombine.low %v122, %v128
    %v199 = vcombine.low %v134, %v140
    %v201 = vunpack.c.l.s4 1983009808
    %v202 = vunpack.c.0.s8 %v201
    %v203 = vlaneseq
    %v204 = vshrl.u32 %v203, 7
    %v205 = vsub.s32 %v202, %v204
    %v206 = vrot.slane %v198, %v205
    %v208 = vunpack.c.l.s4 1983009808
    %v209 = vunpack.c.0.s8 %v208
    %v210 = vlaneseq
    %v211 = vshrl.u32 %v210, 7
    %v212 = vsub.s32 %v209, %v211
    %v213 = vrot.slane %v199, %v212
    %v214 = vcombine.low %v206, %v213
    %v215 = vcombine.low %v146, %v152
    %v217 = vunpack.c.l.s4 1983009808
    %v218 = vunpack.c.0.s8 %v217
    %v219 = vlaneseq
    %v220 = vshrl.u32 %v219, 7
    %v221 = vsub.s32 %v218, %v220
    %v222 = vrot.slane %v215, %v221
    %vm223 = vcmask 1044484
    %v224 = vsel %vm223, %v189, %v189
    %vm225 = vcmask 1046534
    %v226 = vsel %vm225, %v189, %v224
    %v227 = vrot.slane %v214, 7
    %vm228 = vcmask 1041409
    %v229 = vsel %vm228, %v227, %v226
    %vm230 = vcmask 1043459
    %v231 = vsel %vm230, %v227, %v229
    %vm232 = vcmask 1045509
    %v233 = vsel %vm232, %v227, %v231
    %vm234 = vcmask 1047559
    %v235 = vsel %vm234, %v227, %v233
    %v236 = vsel %vm223, %v197, %v197
    %v237 = vsel %vm225, %v197, %v236
    %v238 = vrot.slane %v222, 7
    %v239 = vsel %vm228, %v238, %v237
    %v240 = vsel %vm230, %v238, %v239
    %v241 = vsel %vm232, %v238, %v240
    %v242 = vsel %vm234, %v238, %v241
    %v245 = vadd.f32 %v159, %v235
    %v246 = vadd.f32 %v160, %v242
    %247 = vst [vmem:[#allocation2] sm:$0xff] %v245
    %248 = vst [vmem:[#allocation2 + $0x8] sm:$0xf] %v246
    // Predicated region
    $region38: #{tpu_custom_call.1} parent=1 // pred_check
      %p249 = pneg %p153
    $region39: #{tpu_custom_call.1} parent=1 // pred_check_branch
      %251 = sbr.rel (%p249) target = $region41
    $region40: #{tpu_custom_call.1} parent=1 // pred_region
      %v252 = vld [vmem:[#allocation2] sm:$0xff]
      %v253 = vld [vmem:[#allocation2 + $0x8] sm:$0xf]
      %v256 = vcombine.high %v252, %v252
      %v258 = vunpack.c.l.s4 1983009808
      %v259 = vunpack.c.0.s8 %v258
      %v260 = vlaneseq
      %v261 = vshrl.u32 %v260, 7
      %v262 = vsub.s32 %v259, %v261
      %v263 = vrot.slane %v252, %v262
      %v265 = vunpack.c.l.s4 1983009808
      %v266 = vunpack.c.0.s8 %v265
      %v267 = vlaneseq
      %v268 = vshrl.u32 %v267, 7
      %v269 = vsub.s32 %v266, %v268
      %v270 = vrot.slane %v256, %v269
      %v271 = vcombine.high %v263, %v263
      %v272 = vcombine.high %v270, %v270
      %v274 = vunpack.c.l.s4 1983009808
      %v275 = vunpack.c.0.s8 %v274
      %v276 = vlaneseq
      %v277 = vshrl.u32 %v276, 7
      %v278 = vsub.s32 %v275, %v277
      %v279 = vrot.slane %v253, %v278
      %v280 = vcombine.high %v279, %v279
      %v287 = vpack.c.bf16 %v263, %v263
      %v288 = vpack.c.bf16 %v271, %v271
      %v289 = vpack.c.bf16 %v270, %v270
      %v290 = vpack.c.bf16 %v272, %v272
      %v291 = vpack.c.bf16 %v279, %v279
      %v292 = vpack.c.bf16 %v280, %v280
      %v293 = vld [vmem:[#allocation6] sm:$0xf]
      %v294 = vld [vmem:[#allocation6 + $0x4] sm:$0xf]
      %v295 = vld [vmem:[#allocation6 + $0x8] sm:$0xf]
      %v296 = vld [vmem:[#allocation6 + $0xc] sm:$0xf]
      %v297 = vld [vmem:[#allocation6 + $0x10] sm:$0xf]
      %v298 = vld [vmem:[#allocation6 + $0x14] sm:$0xf]
      %v299 = vld [vmem:[#allocation6 + $0x18] sm:$0xf]
      %v300 = vld [vmem:[#allocation6 + $0x1c] sm:$0xf]
      %v301 = vld [vmem:[#allocation6 + $0x20] sm:$0xf]
      %v302 = vld [vmem:[#allocation6 + $0x24] sm:$0xf]
      %v303 = vld [vmem:[#allocation6 + $0x28] sm:$0xf]
      %v304 = vld [vmem:[#allocation6 + $0x2c] sm:$0xf]
      %v305 = vld [vmem:[#allocation6 + $0x30] sm:$0xf]
      %v306 = vld [vmem:[#allocation6 + $0x34] sm:$0xf]
      %v307 = vld [vmem:[#allocation6 + $0x38] sm:$0xf]
      %v308 = vld [vmem:[#allocation6 + $0x3c] sm:$0xf]
      %v309 = vld [vmem:[#allocation6 + $0x40] sm:$0xf]
      %v310 = vld [vmem:[#allocation6 + $0x44] sm:$0xf]
      %v311 = vld [vmem:[#allocation6 + $0x48] sm:$0xf]
      %v312 = vld [vmem:[#allocation6 + $0x4c] sm:$0xf]
      %v313 = vld [vmem:[#allocation6 + $0x50] sm:$0xf]
      %v314 = vld [vmem:[#allocation6 + $0x54] sm:$0xf]
      %v315 = vld [vmem:[#allocation6 + $0x58] sm:$0xf]
      %v316 = vld [vmem:[#allocation6 + $0x5c] sm:$0xf]
      %v317 = vld [vmem:[#allocation6 + $0x60] sm:$0xf]
      %v318 = vld [vmem:[#allocation6 + $0x64] sm:$0xf]
      %v319 = vld [vmem:[#allocation6 + $0x68] sm:$0xf]
      %v320 = vld [vmem:[#allocation6 + $0x6c] sm:$0xf]
      %v321 = vld [vmem:[#allocation6 + $0x70] sm:$0xf]
      %v322 = vld [vmem:[#allocation6 + $0x74] sm:$0xf]
      %v323 = vld [vmem:[#allocation6 + $0x78] sm:$0xf]
      %v324 = vld [vmem:[#allocation6 + $0x7c] sm:$0xf]
      %v325 = vld [vmem:[#allocation6 + $0x80] sm:$0xf]
      %v326 = vld [vmem:[#allocation6 + $0x84] sm:$0xf]
      %v327 = vld [vmem:[#allocation6 + $0x88] sm:$0xf]
      %v328 = vld [vmem:[#allocation6 + $0x8c] sm:$0xf]
      %v329 = vld [vmem:[#allocation6 + $0x90] sm:$0xf]
      %v330 = vld [vmem:[#allocation6 + $0x94] sm:$0xf]
      %v331 = vld [vmem:[#allocation6 + $0x98] sm:$0xf]
      %v332 = vld [vmem:[#allocation6 + $0x9c] sm:$0xf]
      %v333 = vld [vmem:[#allocation6 + $0xa0] sm:$0xf]
      %v334 = vld [vmem:[#allocation6 + $0xa4] sm:$0xf]
      %v335 = vld [vmem:[#allocation6 + $0xa8] sm:$0xf]
      %v336 = vld [vmem:[#allocation6 + $0xac] sm:$0xf]
      %v337 = vld [vmem:[#allocation6 + $0xb0] sm:$0xf]
      %v338 = vld [vmem:[#allocation6 + $0xb4] sm:$0xf]
      %v339 = vld [vmem:[#allocation6 + $0xb8] sm:$0xf]
      %v340 = vld [vmem:[#allocation6 + $0xbc] sm:$0xf]
      %v341 = vld [vmem:[#allocation6 + $0xc0] sm:$0xf]
      %v342 = vld [vmem:[#allocation6 + $0xc4] sm:$0xf]
      %v343 = vld [vmem:[#allocation6 + $0xc8] sm:$0xf]
      %v344 = vld [vmem:[#allocation6 + $0xcc] sm:$0xf]
      %v345 = vld [vmem:[#allocation6 + $0xd0] sm:$0xf]
      %v346 = vld [vmem:[#allocation6 + $0xd4] sm:$0xf]
      %v347 = vld [vmem:[#allocation6 + $0xd8] sm:$0xf]
      %v348 = vld [vmem:[#allocation6 + $0xdc] sm:$0xf]
      %v349 = vld [vmem:[#allocation6 + $0xe0] sm:$0xf]
      %v350 = vld [vmem:[#allocation6 + $0xe4] sm:$0xf]
      %v351 = vld [vmem:[#allocation6 + $0xe8] sm:$0xf]
      %v352 = vld [vmem:[#allocation6 + $0xec] sm:$0xf]
      %v353 = vld [vmem:[#allocation6 + $0xf0] sm:$0xf]
      %v354 = vld [vmem:[#allocation6 + $0xf4] sm:$0xf]
      %v355 = vld [vmem:[#allocation6 + $0xf8] sm:$0xf]
      %v356 = vld [vmem:[#allocation6 + $0xfc] sm:$0xf]
      %v357 = vld [vmem:[#allocation6 + $0x100] sm:$0xf]
      %v358 = vld [vmem:[#allocation6 + $0x104] sm:$0xf]
      %v359 = vld [vmem:[#allocation6 + $0x108] sm:$0xf]
      %v360 = vld [vmem:[#allocation6 + $0x10c] sm:$0xf]
      %v361 = vld [vmem:[#allocation6 + $0x110] sm:$0xf]
      %v362 = vld [vmem:[#allocation6 + $0x114] sm:$0xf]
      %v363 = vld [vmem:[#allocation6 + $0x118] sm:$0xf]
      %v364 = vld [vmem:[#allocation6 + $0x11c] sm:$0xf]
      %v365 = vld [vmem:[#allocation6 + $0x120] sm:$0xf]
      %v366 = vld [vmem:[#allocation6 + $0x124] sm:$0xf]
      %v367 = vld [vmem:[#allocation6 + $0x128] sm:$0xf]
      %v368 = vld [vmem:[#allocation6 + $0x12c] sm:$0xf]
      %v369 = vld [vmem:[#allocation6 + $0x130] sm:$0xf]
      %v370 = vld [vmem:[#allocation6 + $0x134] sm:$0xf]
      %v371 = vld [vmem:[#allocation6 + $0x138] sm:$0xf]
      %v372 = vld [vmem:[#allocation6 + $0x13c] sm:$0xf]
      %v373 = vld [vmem:[#allocation6 + $0x140] sm:$0xf]
      %v374 = vld [vmem:[#allocation6 + $0x144] sm:$0xf]
      %v375 = vld [vmem:[#allocation6 + $0x148] sm:$0xf]
      %v376 = vld [vmem:[#allocation6 + $0x14c] sm:$0xf]
      %v377 = vld [vmem:[#allocation6 + $0x150] sm:$0xf]
      %v378 = vld [vmem:[#allocation6 + $0x154] sm:$0xf]
      %v379 = vld [vmem:[#allocation6 + $0x158] sm:$0xf]
      %v380 = vld [vmem:[#allocation6 + $0x15c] sm:$0xf]
      %v381 = vld [vmem:[#allocation6 + $0x160] sm:$0xf]
      %v382 = vld [vmem:[#allocation6 + $0x164] sm:$0xf]
      %v383 = vld [vmem:[#allocation6 + $0x168] sm:$0xf]
      %v384 = vld [vmem:[#allocation6 + $0x16c] sm:$0xf]
      %v385 = vld [vmem:[#allocation6 + $0x170] sm:$0xf]
      %v386 = vld [vmem:[#allocation6 + $0x174] sm:$0xf]
      %v387 = vld [vmem:[#allocation6 + $0x178] sm:$0xf]
      %v388 = vld [vmem:[#allocation6 + $0x17c] sm:$0xf]
      %v389 = vld [vmem:[%s2] sm:$0x1]
      %v391 = vlaneseq
      %v392 = vshrl.u32 %v391, 7
      %v393 = vsub.s32 0, %v392
      %v394 = vrot.slane %v389, %v393
      %v492 = vunpack.c.l.b16 %v293
      %v493 = vunpack.c.l.b16 %v294
      %v494 = vunpack.c.l.b16 %v295
      %v495 = vunpack.c.l.b16 %v296
      %v496 = vunpack.c.l.b16 %v297
      %v497 = vunpack.c.l.b16 %v298
      %v498 = vunpack.c.l.b16 %v299
      %v499 = vunpack.c.l.b16 %v300
      %v500 = vunpack.c.l.b16 %v301
      %v501 = vunpack.c.l.b16 %v302
      %v502 = vunpack.c.l.b16 %v303
      %v503 = vunpack.c.l.b16 %v304
      %v504 = vunpack.c.l.b16 %v305
      %v505 = vunpack.c.l.b16 %v306
      %v506 = vunpack.c.l.b16 %v307
      %v507 = vunpack.c.l.b16 %v308
      %v508 = vunpack.c.l.b16 %v309
      %v509 = vunpack.c.l.b16 %v310
      %v510 = vunpack.c.l.b16 %v311
      %v511 = vunpack.c.l.b16 %v312
      %v512 = vunpack.c.l.b16 %v313
      %v513 = vunpack.c.l.b16 %v314
      %v514 = vunpack.c.l.b16 %v315
      %v515 = vunpack.c.l.b16 %v316
      %v516 = vunpack.c.l.b16 %v317
      %v517 = vunpack.c.l.b16 %v318
      %v518 = vunpack.c.l.b16 %v319
      %v519 = vunpack.c.l.b16 %v320
      %v520 = vunpack.c.l.b16 %v321
      %v521 = vunpack.c.l.b16 %v322
      %v522 = vunpack.c.l.b16 %v323
      %v523 = vunpack.c.l.b16 %v324
      %v524 = vunpack.c.l.b16 %v325
      %v525 = vunpack.c.l.b16 %v326
      %v526 = vunpack.c.l.b16 %v327
      %v527 = vunpack.c.l.b16 %v328
      %v528 = vunpack.c.l.b16 %v329
      %v529 = vunpack.c.l.b16 %v330
      %v530 = vunpack.c.l.b16 %v331
      %v531 = vunpack.c.l.b16 %v332
      %v532 = vunpack.c.l.b16 %v333
      %v533 = vunpack.c.l.b16 %v334
      %v534 = vunpack.c.l.b16 %v335
      %v535 = vunpack.c.l.b16 %v336
      %v536 = vunpack.c.l.b16 %v337
      %v537 = vunpack.c.l.b16 %v338
      %v538 = vunpack.c.l.b16 %v339
      %v539 = vunpack.c.l.b16 %v340
      %v540 = vunpack.c.l.b16 %v341
      %v541 = vunpack.c.l.b16 %v342
      %v542 = vunpack.c.l.b16 %v343
      %v543 = vunpack.c.l.b16 %v344
      %v544 = vunpack.c.l.b16 %v345
      %v545 = vunpack.c.l.b16 %v346
      %v546 = vunpack.c.l.b16 %v347
      %v547 = vunpack.c.l.b16 %v348
      %v548 = vunpack.c.l.b16 %v349
      %v549 = vunpack.c.l.b16 %v350
      %v550 = vunpack.c.l.b16 %v351
      %v551 = vunpack.c.l.b16 %v352
      %v552 = vunpack.c.l.b16 %v353
      %v553 = vunpack.c.l.b16 %v354
      %v554 = vunpack.c.l.b16 %v355
      %v555 = vunpack.c.l.b16 %v356
      %v556 = vunpack.c.l.b16 %v357
      %v557 = vunpack.c.l.b16 %v358
      %v558 = vunpack.c.l.b16 %v359
      %v559 = vunpack.c.l.b16 %v360
      %v560 = vunpack.c.l.b16 %v361
      %v561 = vunpack.c.l.b16 %v362
      %v562 = vunpack.c.l.b16 %v363
      %v563 = vunpack.c.l.b16 %v364
      %v564 = vunpack.c.l.b16 %v365
      %v565 = vunpack.c.l.b16 %v366
      %v566 = vunpack.c.l.b16 %v367
      %v567 = vunpack.c.l.b16 %v368
      %v568 = vunpack.c.l.b16 %v369
      %v569 = vunpack.c.l.b16 %v370
      %v570 = vunpack.c.l.b16 %v371
      %v571 = vunpack.c.l.b16 %v372
      %v572 = vunpack.c.l.b16 %v373
      %v573 = vunpack.c.l.b16 %v374
      %v574 = vunpack.c.l.b16 %v375
      %v575 = vunpack.c.l.b16 %v376
      %v576 = vunpack.c.l.b16 %v377
      %v577 = vunpack.c.l.b16 %v378
      %v578 = vunpack.c.l.b16 %v379
      %v579 = vunpack.c.l.b16 %v380
      %v580 = vunpack.c.l.b16 %v381
      %v581 = vunpack.c.l.b16 %v382
      %v582 = vunpack.c.l.b16 %v383
      %v583 = vunpack.c.l.b16 %v384
      %v584 = vunpack.c.l.b16 %v385
      %v585 = vunpack.c.l.b16 %v386
      %v586 = vunpack.c.l.b16 %v387
      %v587 = vunpack.c.l.b16 %v388
      %v588 = vpack.c.b16 %v493, %v492
      %v589 = vpack.c.b16 %v495, %v494
      %v590 = vpack.c.b16 %v497, %v496
      %v591 = vpack.c.b16 %v499, %v498
      %v592 = vpack.c.b16 %v501, %v500
      %v593 = vpack.c.b16 %v503, %v502
      %v594 = vpack.c.b16 %v505, %v504
      %v595 = vpack.c.b16 %v507, %v506
      %v596 = vpack.c.b16 %v509, %v508
      %v597 = vpack.c.b16 %v511, %v510
      %v598 = vpack.c.b16 %v513, %v512
      %v599 = vpack.c.b16 %v515, %v514
      %v600 = vpack.c.b16 %v517, %v516
      %v601 = vpack.c.b16 %v519, %v518
      %v602 = vpack.c.b16 %v521, %v520
      %v603 = vpack.c.b16 %v523, %v522
      %v604 = vpack.c.b16 %v525, %v524
      %v605 = vpack.c.b16 %v527, %v526
      %v606 = vpack.c.b16 %v529, %v528
      %v607 = vpack.c.b16 %v531, %v530
      %v608 = vpack.c.b16 %v533, %v532
      %v609 = vpack.c.b16 %v535, %v534
      %v610 = vpack.c.b16 %v537, %v536
      %v611 = vpack.c.b16 %v539, %v538
      %v612 = vpack.c.b16 %v541, %v540
      %v613 = vpack.c.b16 %v543, %v542
      %v614 = vpack.c.b16 %v545, %v544
      %v615 = vpack.c.b16 %v547, %v546
      %v616 = vpack.c.b16 %v549, %v548
      %v617 = vpack.c.b16 %v551, %v550
      %v618 = vpack.c.b16 %v553, %v552
      %v619 = vpack.c.b16 %v555, %v554
      %v620 = vpack.c.b16 %v557, %v556
      %v621 = vpack.c.b16 %v559, %v558
      %v622 = vpack.c.b16 %v561, %v560
      %v623 = vpack.c.b16 %v563, %v562
      %v624 = vpack.c.b16 %v565, %v564
      %v625 = vpack.c.b16 %v567, %v566
      %v626 = vpack.c.b16 %v569, %v568
      %v627 = vpack.c.b16 %v571, %v570
      %v628 = vpack.c.b16 %v573, %v572
      %v629 = vpack.c.b16 %v575, %v574
      %v630 = vpack.c.b16 %v577, %v576
      %v631 = vpack.c.b16 %v579, %v578
      %v632 = vpack.c.b16 %v581, %v580
      %v633 = vpack.c.b16 %v583, %v582
      %v634 = vpack.c.b16 %v585, %v584
      %v635 = vpack.c.b16 %v587, %v586
      %684 = vmatprep.subr.bf16.mxu0 0
      %685 = vmatpush1.bf16.msra.mxu0 %v588
      %686 = vmatprep.subr.bf16.mxu0 0
      %687 = vmatpush1.bf16.msra.mxu0 %v589
      %688 = vmatprep.subr.bf16.mxu0 0
      %689 = vmatpush1.bf16.msra.mxu0 %v590
      %690 = vmatprep.subr.bf16.mxu0 0
      %691 = vmatpush1.bf16.msra.mxu0 %v591
      %692 = vmatprep.subr.bf16.mxu0 0
      %693 = vmatpush1.bf16.msra.mxu0 %v592
      %694 = vmatprep.subr.bf16.mxu0 0
      %695 = vmatpush1.bf16.msra.mxu0 %v593
      %696 = vmatprep.subr.bf16.mxu0 0
      %697 = vmatpush1.bf16.msra.mxu0 %v594
      %698 = vmatprep.subr.bf16.mxu0 0
      %699 = vmatpush1.bf16.msra.mxu0 %v595
      %700 = vmatprep.subr.bf16.mxu0 0
      %701 = vmatpush1.bf16.msra.mxu0 %v596
      %702 = vmatprep.subr.bf16.mxu0 0
      %703 = vmatpush1.bf16.msra.mxu0 %v597
      %704 = vmatprep.subr.bf16.mxu0 0
      %705 = vmatpush1.bf16.msra.mxu0 %v598
      %706 = vmatprep.subr.bf16.mxu0 0
      %707 = vmatpush1.bf16.msra.mxu0 %v599
      %708 = vmatprep.subr.bf16.mxu0 0
      %709 = vmatpush1.bf16.msra.mxu0 %v600
      %710 = vmatprep.subr.bf16.mxu0 0
      %711 = vmatpush1.bf16.msra.mxu0 %v601
      %712 = vmatprep.subr.bf16.mxu0 0
      %713 = vmatpush1.bf16.msra.mxu0 %v602
      %714 = vmatprep.subr.bf16.mxu0 0
      %715 = vmatpush1.bf16.msra.mxu0 %v603
      %716 = vmatprep.mubr.bf16.mxu0 %v288
      %717 = vmatmul.mubr.bf16.gmra.mrb[0].mxu0 %v287
      %v718 = vpop.f32.mrb[0].mxu0
      %v719 = vadd.f32 %v394, %v718
      %v720 = vpop.f32.mrb[0].mxu0
      %v721 = vpop.f32.mrb[0].mxu0
      %v722 = vpop.f32.mrb[0].mxu0
      %723 = vdwg.mxu0
      %724 = vmatprep.subr.bf16.mxu0 0
      %725 = vmatpush1.bf16.msra.mxu0 %v604
      %726 = vmatprep.subr.bf16.mxu0 0
      %727 = vmatpush1.bf16.msra.mxu0 %v605
      %728 = vmatprep.subr.bf16.mxu0 0
      %729 = vmatpush1.bf16.msra.mxu0 %v606
      %730 = vmatprep.subr.bf16.mxu0 0
      %731 = vmatpush1.bf16.msra.mxu0 %v607
      %732 = vmatprep.subr.bf16.mxu0 0
      %733 = vmatpush1.bf16.msra.mxu0 %v608
      %734 = vmatprep.subr.bf16.mxu0 0
      %735 = vmatpush1.bf16.msra.mxu0 %v609
      %736 = vmatprep.subr.bf16.mxu0 0
      %737 = vmatpush1.bf16.msra.mxu0 %v610
      %738 = vmatprep.subr.bf16.mxu0 0
      %739 = vmatpush1.bf16.msra.mxu0 %v611
      %740 = vmatprep.subr.bf16.mxu0 0
      %741 = vmatpush1.bf16.msra.mxu0 %v612
      %742 = vmatprep.subr.bf16.mxu0 0
      %743 = vmatpush1.bf16.msra.mxu0 %v613
      %744 = vmatprep.subr.bf16.mxu0 0
      %745 = vmatpush1.bf16.msra.mxu0 %v614
      %746 = vmatprep.subr.bf16.mxu0 0
      %747 = vmatpush1.bf16.msra.mxu0 %v615
      %748 = vmatprep.subr.bf16.mxu0 0
      %749 = vmatpush1.bf16.msra.mxu0 %v616
      %750 = vmatprep.subr.bf16.mxu0 0
      %751 = vmatpush1.bf16.msra.mxu0 %v617
      %752 = vmatprep.subr.bf16.mxu0 0
      %753 = vmatpush1.bf16.msra.mxu0 %v618
      %754 = vmatprep.subr.bf16.mxu0 0
      %755 = vmatpush1.bf16.msra.mxu0 %v619
      %756 = vmatprep.mubr.bf16.mxu0 %v290
      %757 = vmatmul.mubr.bf16.gmra.mrb[0].mxu0 %v289
      %v758 = vpop.f32.mrb[0].mxu0
      %v759 = vadd.f32 %v719, %v758
      %v760 = vpop.f32.mrb[0].mxu0
      %v761 = vpop.f32.mrb[0].mxu0
      %v762 = vpop.f32.mrb[0].mxu0
      %763 = vdwg.mxu0
      %764 = vmatprep.subr.bf16.mxu0 0
      %765 = vmatpush1.bf16.msra.mxu0 %v620
      %766 = vmatprep.subr.bf16.mxu0 0
      %767 = vmatpush1.bf16.msra.mxu0 %v621
      %768 = vmatprep.subr.bf16.mxu0 0
      %769 = vmatpush1.bf16.msra.mxu0 %v622
      %770 = vmatprep.subr.bf16.mxu0 0
      %771 = vmatpush1.bf16.msra.mxu0 %v623
      %772 = vmatprep.subr.bf16.mxu0 0
      %773 = vmatpush1.bf16.msra.mxu0 %v624
      %774 = vmatprep.subr.bf16.mxu0 0
      %775 = vmatpush1.bf16.msra.mxu0 %v625
      %776 = vmatprep.subr.bf16.mxu0 0
      %777 = vmatpush1.bf16.msra.mxu0 %v626
      %778 = vmatprep.subr.bf16.mxu0 0
      %779 = vmatpush1.bf16.msra.mxu0 %v627
      %780 = vmatprep.subr.bf16.mxu0 0
      %781 = vmatpush1.bf16.msra.mxu0 %v628
      %782 = vmatprep.subr.bf16.mxu0 0
      %783 = vmatpush1.bf16.msra.mxu0 %v629
      %784 = vmatprep.subr.bf16.mxu0 0
      %785 = vmatpush1.bf16.msra.mxu0 %v630
      %786 = vmatprep.subr.bf16.mxu0 0
      %787 = vmatpush1.bf16.msra.mxu0 %v631
      %788 = vmatprep.subr.bf16.mxu0 0
      %789 = vmatpush1.bf16.msra.mxu0 %v632
      %790 = vmatprep.subr.bf16.mxu0 0
      %791 = vmatpush1.bf16.msra.mxu0 %v633
      %792 = vmatprep.subr.bf16.mxu0 0
      %793 = vmatpush1.bf16.msra.mxu0 %v634
      %794 = vmatprep.subr.bf16.mxu0 0
      %795 = vmatpush1.bf16.msra.mxu0 %v635
      %796 = vmatprep.mubr.bf16.mxu0 %v292
      %797 = vmatmul.mubr.bf16.gmra.mrb[0].mxu0 %v291
      %v798 = vpop.f32.mrb[0].mxu0
      %v799 = vadd.f32 %v759, %v798
      %v800 = vpop.f32.mrb[0].mxu0
      %v801 = vpop.f32.mrb[0].mxu0
      %v802 = vpop.f32.mrb[0].mxu0
      %803 = vdwg.mxu0
      %v804 = vmax.f32 %v799, 0.0
      %v805 = vld [vmem:[#allocation8] sm:$0xff]
      %v806 = vld [vmem:[#allocation8 + $0x8] sm:$0xff]
      %v807 = vld [vmem:[#allocation8 + $0x10] sm:$0xff]
      %v808 = vld [vmem:[#allocation8 + $0x18] sm:$0xff]
      %v809 = vld [vmem:[#allocation8 + $0x20] sm:$0xff]
      %v810 = vld [vmem:[#allocation8 + $0x28] sm:$0xff]
      %v811 = vld [vmem:[#allocation8 + $0x30] sm:$0xff]
      %v812 = vld [vmem:[#allocation8 + $0x38] sm:$0xff]
      %v813 = vld [vmem:[#allocation8 + $0x40] sm:$0xff]
      %v814 = vld [vmem:[#allocation8 + $0x48] sm:$0xff]
      %v815 = vld [vmem:[#allocation8 + $0x50] sm:$0xff]
      %v816 = vld [vmem:[#allocation8 + $0x58] sm:$0xff]
      %v817 = vld [vmem:[#allocation8 + $0x60] sm:$0xff]
      %v818 = vld [vmem:[#allocation8 + $0x68] sm:$0xff]
      %v819 = vld [vmem:[#allocation8 + $0x70] sm:$0xff]
      %v820 = vld [vmem:[#allocation8 + $0x78] sm:$0xff]
      %v821 = vld [vmem:[%s4] sm:$0x1]
      %v823 = vlaneseq
      %v824 = vshrl.u32 %v823, 7
      %v825 = vsub.s32 0, %v824
      %v826 = vrot.slane %v821, %v825
      %828 = vmatprep.subr.mxu0 0.0
      %829 = vmatpush1.msra.mxu0 %v805
      %830 = vmatprep.subr.mxu0 0.0
      %831 = vmatpush1.msra.mxu0 %v806
      %832 = vmatprep.subr.mxu0 0.0
      %833 = vmatpush1.msra.mxu0 %v807
      %834 = vmatprep.subr.mxu0 0.0
      %835 = vmatpush1.msra.mxu0 %v808
      %836 = vmatprep.subr.mxu0 0.0
      %837 = vmatpush1.msra.mxu0 %v809
      %838 = vmatprep.subr.mxu0 0.0
      %839 = vmatpush1.msra.mxu0 %v810
      %840 = vmatprep.subr.mxu0 0.0
      %841 = vmatpush1.msra.mxu0 %v811
      %842 = vmatprep.subr.mxu0 0.0
      %843 = vmatpush1.msra.mxu0 %v812
      %844 = vmatprep.subr.mxu0 0.0
      %845 = vmatpush1.msra.mxu0 %v813
      %846 = vmatprep.subr.mxu0 0.0
      %847 = vmatpush1.msra.mxu0 %v814
      %848 = vmatprep.subr.mxu0 0.0
      %849 = vmatpush1.msra.mxu0 %v815
      %850 = vmatprep.subr.mxu0 0.0
      %851 = vmatpush1.msra.mxu0 %v816
      %852 = vmatprep.subr.mxu0 0.0
      %853 = vmatpush1.msra.mxu0 %v817
      %854 = vmatprep.subr.mxu0 0.0
      %855 = vmatpush1.msra.mxu0 %v818
      %856 = vmatprep.subr.mxu0 0.0
      %857 = vmatpush1.msra.mxu0 %v819
      %858 = vmatprep.subr.mxu0 0.0
      %859 = vmatpush1.msra.mxu0 %v820
      %860 = vmatprep.subr.mxu0 0.0
      %861 = vmatpush1.msra.mxu0 0.0
      %862 = vmatprep.subr.mxu0 0.0
      %863 = vmatpush1.msra.mxu0 0.0
      %864 = vmatprep.subr.mxu0 0.0
      %865 = vmatpush1.msra.mxu0 0.0
      %866 = vmatprep.subr.mxu0 0.0
      %867 = vmatpush1.msra.mxu0 0.0
      %868 = vmatprep.subr.mxu0 0.0
      %869 = vmatpush1.msra.mxu0 0.0
      %870 = vmatprep.subr.mxu0 0.0
      %871 = vmatpush1.msra.mxu0 0.0
      %872 = vmatprep.subr.mxu0 0.0
      %873 = vmatpush1.msra.mxu0 0.0
      %874 = vmatprep.subr.mxu0 0.0
      %875 = vmatpush1.msra.mxu0 0.0
      %876 = vmatprep.subr.mxu0 0.0
      %877 = vmatpush1.msra.mxu0 0.0
      %878 = vmatprep.subr.mxu0 0.0
      %879 = vmatpush1.msra.mxu0 0.0
      %880 = vmatprep.subr.mxu0 0.0
      %881 = vmatpush1.msra.mxu0 0.0
      %882 = vmatprep.subr.mxu0 0.0
      %883 = vmatpush1.msra.mxu0 0.0
      %884 = vmatprep.subr.mxu0 0.0
      %885 = vmatpush1.msra.mxu0 0.0
      %886 = vmatprep.subr.mxu0 0.0
      %887 = vmatpush1.msra.mxu0 0.0
      %888 = vmatprep.subr.mxu0 0.0
      %889 = vmatpush1.msra.mxu0 0.0
      %890 = vmatprep.subr.mxu0 0.0
      %891 = vmatpush1.msra.mxu0 0.0
      %892 = vmatprep.mubr.f32.mxu0 0.0
      %893 = vmatmul.mubr.f32.gmra.mrb[0].mxu0 %v804
      %v894 = vpop.f32.mrb[0].mxu0
      %v895 = vadd.f32 %v826, %v894
      %v896 = vpop.f32.mrb[0].mxu0
      %897 = vdwg.mxu0
      %898 = vst [vmem:[#allocation9] sm:$0x3] %v895
    $region41: #{tpu_custom_call.1} parent=1 // pred_fallthru
      _
    // Predicated region
    $region42: #{tpu_custom_call.1} parent=1 // pred_check
      _
    $region43: #{tpu_custom_call.1} parent=1 // pred_check_branch
      %900 = sbr.rel (0) target = $region45
    $region44: #{tpu_custom_call.1} parent=1 // pred_region
      %s902 = ssub.s32 32, 32
      %903 = vsyncadd [#allocation5], %s902
      %s905 = sshll.u32 [#allocation9], 4
      %s906 = int_to_ptr.vmem [resolvable:$true] %s905
      %908 = dma.vmem_to_hbm [thread:$0]  %s906, 32, %s5, [#allocation5]
    $region45: #{tpu_custom_call.1} parent=1 // pred_fallthru
      _
    // Predicated region
    $region46: #{tpu_custom_call.1} parent=1 // pred_check
      _
    $region47: #{tpu_custom_call.1} parent=1 // pred_check_branch
      %910 = sbr.rel (0) target = $region49
    $region48: #{tpu_custom_call.1} parent=1 // pred_region
      %911 = dma.done [#allocation5], 32
    $region49: #{tpu_custom_call.1} parent=1 // pred_fallthru
      _
    %912 = vsyncpa [#allocation4], 1
    %913 = vsyncpa [#allocation7], 1
    %914 = vsyncpa [#allocation5], 1

</llo_original>
